<compile_context>
chip_gen: v5e
topology: v5e:2x2
jax: 0.10.0
libtpu: 0.0.40
codegen_flags: <defaults>
</compile_context>

<pallas_src>
import functools

import jax
import jax.numpy as jnp
from jax import lax
from jax.experimental import pallas as pl
from jax.experimental.pallas import tpu as pltpu

EPS = 1e-5  # torch.nn.BatchNorm2d default eps

_VMEM_LIMIT = 48 * 1024 * 1024    # scoped VMEM limit; safe on v5e/v6e (128 MiB) and v7x (64 MiB)
_TILE_BUDGET = 24 * 1024 * 1024   # target for the double-buffered per-step working set


# ---------------------------------------------------------------------------
# Pass 1: per-image conv sum / sum-of-squares (BatchNorm batch statistics).
# ---------------------------------------------------------------------------
def _stats_kernel(xs_ref, w_ref, stats_ref, acc_ref):
    # xs_ref   : (1, K, TM)    bf16  patch slab, output pixels lane-dense
    # w_ref    : (OC, K)       bf16
    # stats_ref: (1, 2, OC, 1) f32   [sum; sum_sq] per channel, stored once/image
    # acc_ref  : (2, OC, 1)    f32   VMEM accumulator across the row-tile axis
    t = pl.program_id(1)

    conv = jnp.dot(w_ref[...], xs_ref[0], preferred_element_type=jnp.float32)  # (OC, TM)

    @pl.when(t == 0)
    def _():
        acc_ref[...] = jnp.zeros_like(acc_ref)

    acc_ref[0] = acc_ref[0] + jnp.sum(conv, axis=1, keepdims=True)
    acc_ref[1] = acc_ref[1] + jnp.sum(conv * conv, axis=1, keepdims=True)

    @pl.when(t == pl.num_programs(1) - 1)
    def _():
        stats_ref[0] = acc_ref[...]


# ---------------------------------------------------------------------------
# Pass 2: fused conv + folded-BN affine + ReLU on one lane-dense [OC, TM] tile.
# ---------------------------------------------------------------------------
def _conv_bn_relu_kernel(xs_ref, w_ref, ss_ref, o_ref):
    # xs_ref: (1, K, TM) bf16, w_ref: (OC, K) bf16, ss_ref: (2, OC, 1) f32
    conv = jnp.dot(w_ref[...], xs_ref[0], preferred_element_type=jnp.float32)  # (OC, TM)
    y = conv * ss_ref[0] + ss_ref[1]
    # TODO(synk): emit bf16 here if the downstream consumer accepts bf16 activations.
    o_ref[0, :, :] = jnp.maximum(y, 0.0).astype(o_ref.dtype)


def _pick_tile_rows(OH, OW, K, OC):
    """Largest TH dividing OH with lane-dense TM = TH*OW (multiple of 128) whose
    double-buffered working set fits the VMEM tile budget."""
    # Pass 2 dominates the per-lane working set: bf16 input band + f32 output,
    # both double-buffered.
    bytes_per_lane = 2 * (2 * K + 4 * OC)
    best = None
    for th in range(1, OH + 1):
        if OH % th:
            continue
        tm = th * OW
        if tm % 128 != 0:
            continue
        if tm * bytes_per_lane > _TILE_BUDGET:
            continue
        best = th
    if best is not None:
        return best
    # Fallback: whole image as one (possibly lane-masked) tile — the BlockSpec
    # lane dim must be a multiple of 128 or the full extent.
    return OH


@functools.partial(jax.jit, static_argnames=("k", "s", "p"))
def conv2d_bn_relu(x, weight, bias, gamma, beta, *, k, s, p):
    """Forward of voxel_net.Conv2d (activation=True, batch_norm=True).

    x: (N, C, H, W) f32, weight: (OC, C, k, k), bias/gamma/beta: (OC,).
    Returns (N, OC, OH, OW) f32.  `bias` is accepted but unused: under
    training-mode BatchNorm it is absorbed by the batch mean and cancels
    exactly in the output (and dropping it improves the conditioning of the
    sum / sum-of-squares statistics).
    """
    del bias
    N, C, H, W = x.shape
    OC = weight.shape[0]
    OH = (H + 2 * p - k) // s + 1
    OW = (W + 2 * p - k) // s + 1
    K = k * k * C

    # Host-side tap extraction: all k*k shifted views with (tap, channel) folded
    # into one K sublane axis -> the kernel's patch matrix is a contiguous slab.
    # TODO(synk): for large-C backbone layers, replace the k*k duplication with a
    # single padded bf16 copy and in-kernel width taps (pltpu.roll / shifted slices).
    x_pad = jnp.pad(x, ((0, 0), (0, 0), (p, p), (p, p))).astype(jnp.bfloat16)
    taps = [x_pad[:, :, kh:kh + (OH - 1) * s + 1:s, kw:kw + (OW - 1) * s + 1:s]
            for kh in range(k) for kw in range(k)]
    xs = jnp.stack(taps, axis=1).reshape(N, K, OH * OW)          # (N, K, OH*OW) bf16

    # weight (OC, C, k, k) -> (OC, K) with K ordered (kh, kw, c) to match xs.
    w_t = jnp.transpose(weight, (0, 2, 3, 1)).reshape(OC, K).astype(jnp.bfloat16)

    TH = _pick_tile_rows(OH, OW, K, OC)     # largest lane-dense row tile that fits VMEM
    T = OH // TH
    TM = TH * OW

    cparams_stats = pltpu.CompilerParams(
        dimension_semantics=("parallel", "arbitrary"),  # t sequential: scratch accumulation
        vmem_limit_bytes=_VMEM_LIMIT)
    cparams_main = pltpu.CompilerParams(
        dimension_semantics=("parallel", "parallel"),   # fully parallel (v7x 2-TC friendly)
        vmem_limit_bytes=_VMEM_LIMIT)

    # Pass 1: statistics only — no conv intermediate round-trips HBM.
    stats = pl.pallas_call(
        _stats_kernel,
        out_shape=jax.ShapeDtypeStruct((N, 2, OC, 1), jnp.float32),
        grid=(N, T),
        in_specs=[
            pl.BlockSpec((1, K, TM), lambda n, t: (n, 0, t)),
            pl.BlockSpec((OC, K), lambda n, t: (0, 0)),
        ],
        out_specs=pl.BlockSpec((1, 2, OC, 1), lambda n, t: (n, 0, 0, 0)),
        scratch_shapes=[pltpu.VMEM((2, OC, 1), jnp.float32)],
        compiler_params=cparams_stats,
    )(xs, w_t)

    # Finalize BatchNorm (training-mode batch statistics, biased variance) and
    # fold gamma/beta into one per-channel scale & shift.
    # NOTE: E[x^2] - E[x]^2 in f32; adequate here (bias dropped, zero-mean-ish
    # activations), clamped at 0 for safety.
    m_total = N * OH * OW
    sums = jnp.sum(stats, axis=0)[:, :, 0]                 # (2, OC)
    mean = sums[0] / m_total
    var = jnp.maximum(sums[1] / m_total - mean * mean, 0.0)
    scale = gamma * lax.rsqrt(var + EPS)
    shift = beta - mean * scale
    ss = jnp.stack([scale, shift], axis=0).reshape(2, OC, 1).astype(jnp.float32)

    # Pass 2: fused conv + BN + ReLU; output written as (N, OC, OH*OW) so NCHW
    # is recovered with a free reshape (no transpose / extra HBM round trip).
    out_flat = pl.pallas_call(
        _conv_bn_relu_kernel,
        out_shape=jax.ShapeDtypeStruct((N, OC, OH * OW), jnp.float32),
        grid=(N, T),
        in_specs=[
            pl.BlockSpec((1, K, TM), lambda n, t: (n, 0, t)),
            pl.BlockSpec((OC, K), lambda n, t: (0, 0)),
            pl.BlockSpec((2, OC, 1), lambda n, t: (0, 0, 0)),
        ],
        out_specs=pl.BlockSpec((1, OC, TM), lambda n, t: (n, 0, t)),
        compiler_params=cparams_main,
    )(xs, w_t, ss)

    return out_flat.reshape(N, OC, OH, OW)


def reference(x, weight, bias, gamma, beta, k, s, p):
    # Matches the kernel's numerics: conv operands rounded to bf16, all
    # accumulation and BN math in f32 (training-mode batch statistics).
    xb = x.astype(jnp.bfloat16).astype(jnp.float32)
    wb = weight.astype(jnp.bfloat16).astype(jnp.float32)
    y = lax.conv_general_dilated(
        xb, wb, window_strides=(s, s), padding=((p, p), (p, p)),
        dimension_numbers=("NCHW", "OIHW", "NCHW"),
        precision=lax.Precision.HIGHEST)
    y = y + bias[None, :, None, None]
    mean = jnp.mean(y, axis=(0, 2, 3), keepdims=True)
    var = jnp.mean((y - mean) ** 2, axis=(0, 2, 3), keepdims=True)
    y = (y - mean) * lax.rsqrt(var + EPS)
    y = y * gamma[None, :, None, None] + beta[None, :, None, None]
    return jnp.maximum(y, 0.0)


if __name__ == "__main__":
    # Conv2d(in_channels=4, out_channels=8, k=3, s=1, p=1, activation=True, batch_norm=True)
    N, C, H, W = 2, 4, 16, 16
    OC, k, s, p = 8, 3, 1, 1

    key = jax.random.PRNGKey(0)
    kx, kw_, kb, kg, kbe = jax.random.split(key, 5)
    x = jax.random.normal(kx, (N, C, H, W), dtype=jnp.float32)
    weight = 0.1 * jax.random.normal(kw_, (OC, C, k, k), dtype=jnp.float32)
    bias = 0.1 * jax.random.normal(kb, (OC,), dtype=jnp.float32)
    gamma = 1.0 + 0.1 * jax.random.normal(kg, (OC,), dtype=jnp.float32)
    beta = 0.1 * jax.random.normal(kbe, (OC,), dtype=jnp.float32)

    out = conv2d_bn_relu(x, weight, bias, gamma, beta, k=k, s=s, p=p)
    out = jax.block_until_ready(out)

    ref = reference(x, weight, bias, gamma, beta, k, s, p)
    assert out.shape == (N, OC, H, W), out.shape
    err = float(jnp.max(jnp.abs(out - ref)))
    assert jnp.allclose(out, ref, atol=2e-3, rtol=2e-3), err
    print("KERNEL_OK")
</pallas_src>

<mosaic_0001>
module attributes {stable_mosaic.version = 11 : i64} {
  func.func @_stats_kernel(%arg0: i32, %arg1: i32, %arg2: memref<1x36x256xbf16, #tpu.memory_space<vmem>>, %arg3: memref<8x36xbf16, #tpu.memory_space<vmem>>, %arg4: memref<1x2x8x1xf32, #tpu.memory_space<vmem>>, %arg5: memref<2x8x1xf32, #tpu.memory_space<vmem>>) attributes {dimension_semantics = [#tpu.dimension_semantics<parallel>, #tpu.dimension_semantics<arbitrary>], iteration_bounds = array<i64: 2, 1>, scalar_prefetch = 0 : i64, scratch_operands = 1 : i64, tpu.core_type = #tpu.core_type<tc>, window_params = [{transform_indices = @transform_0, window_bounds = array<i64: 1, 36, 256>}, {pipeline_mode = #tpu.pipeline_mode<synchronous>, transform_indices = @transform_1, window_bounds = array<i64: 8, 36>}, {transform_indices = @transform_2, window_bounds = array<i64: 1, 2, 8, 1>}]} {
    %c0 = arith.constant 0 : index
    %c0_0 = arith.constant 0 : index
    %0 = vector.load %arg3[%c0, %c0_0] : memref<8x36xbf16, #tpu.memory_space<vmem>>, vector<8x36xbf16>
    %c0_1 = arith.constant 0 : index
    %c0_2 = arith.constant 0 : index
    %c0_3 = arith.constant 0 : index
    %1 = vector.load %arg2[%c0_1, %c0_2, %c0_3] : memref<1x36x256xbf16, #tpu.memory_space<vmem>>, vector<1x36x256xbf16>
    %2 = vector.shape_cast %1 : vector<1x36x256xbf16> to vector<36x256xbf16>
    %cst = arith.constant dense<0.000000e+00> : vector<8x256xf32>
    %3 = tpu.matmul %0, %2, %cst {dimension_numbers = #tpu.dot_dimension_numbers<[1], [0], [0], [1], [0, 0, 1, 1], [], []>} : vector<8x36xbf16>, vector<36x256xbf16>, vector<8x256xf32> -> vector<8x256xf32>
    %c0_i32 = arith.constant 0 : i32
    %4 = arith.cmpi eq, %arg1, %c0_i32 : i32
    %5 = arith.extui %4 : i1 to i32
    %c0_i32_4 = arith.constant 0 : i32
    %6 = arith.cmpi ne, %5, %c0_i32_4 : i32
    scf.if %6 {
      %cst_20 = arith.constant 0.000000e+00 : f32
      %27 = vector.broadcast %cst_20 : f32 to vector<2x8x1xf32>
      %c0_21 = arith.constant 0 : index
      %c0_22 = arith.constant 0 : index
      %c0_23 = arith.constant 0 : index
      %28 = vector.load %arg5[%c0_21, %c0_22, %c0_23] : memref<2x8x1xf32, #tpu.memory_space<vmem>>, vector<2x8x1xf32>
      tpu.vector_store %arg5[%c0_21, %c0_22, %c0_23], %27 {strides = array<i32>} : memref<2x8x1xf32, #tpu.memory_space<vmem>>, vector<2x8x1xf32>,
    } else {
    }
    %c0_5 = arith.constant 0 : index
    %c0_6 = arith.constant 0 : index
    %c0_7 = arith.constant 0 : index
    %7 = vector.load %arg5[%c0_5, %c0_6, %c0_7] : memref<2x8x1xf32, #tpu.memory_space<vmem>>, vector<1x8x1xf32>
    %8 = vector.shape_cast %7 : vector<1x8x1xf32> to vector<8x1xf32>
    %cst_8 = arith.constant dense<0.000000e+00> : vector<8xf32>
    %9 = vector.multi_reduction <add>, %3, %cst_8 [1] : vector<8x256xf32> to vector<8xf32>
    %10 = vector.shape_cast %9 : vector<8xf32> to vector<8x1xf32>
    %11 = arith.addf %8, %10 : vector<8x1xf32>
    %c0_9 = arith.constant 0 : index
    %c0_10 = arith.constant 0 : index
    %c0_11 = arith.constant 0 : index
    %12 = vector.load %arg5[%c0_9, %c0_10, %c0_11] : memref<2x8x1xf32, #tpu.memory_space<vmem>>, vector<1x8x1xf32>
    %13 = vector.shape_cast %12 : vector<1x8x1xf32> to vector<8x1xf32>
    %14 = vector.shape_cast %11 : vector<8x1xf32> to vector<1x8x1xf32>
    tpu.vector_store %arg5[%c0_9, %c0_10, %c0_11], %14 {strides = array<i32>} : memref<2x8x1xf32, #tpu.memory_space<vmem>>, vector<1x8x1xf32>,
    %c1 = arith.constant 1 : index
    %c0_12 = arith.constant 0 : index
    %c0_13 = arith.constant 0 : index
    %15 = vector.load %arg5[%c1, %c0_12, %c0_13] : memref<2x8x1xf32, #tpu.memory_space<vmem>>, vector<1x8x1xf32>
    %16 = vector.shape_cast %15 : vector<1x8x1xf32> to vector<8x1xf32>
    %17 = arith.mulf %3, %3 : vector<8x256xf32>
    %cst_14 = arith.constant dense<0.000000e+00> : vector<8xf32>
    %18 = vector.multi_reduction <add>, %17, %cst_14 [1] : vector<8x256xf32> to vector<8xf32>
    %19 = vector.shape_cast %18 : vector<8xf32> to vector<8x1xf32>
    %20 = arith.addf %16, %19 : vector<8x1xf32>
    %c1_15 = arith.constant 1 : index
    %c0_16 = arith.constant 0 : index
    %c0_17 = arith.constant 0 : index
    %21 = vector.load %arg5[%c1_15, %c0_16, %c0_17] : memref<2x8x1xf32, #tpu.memory_space<vmem>>, vector<1x8x1xf32>
    %22 = vector.shape_cast %21 : vector<1x8x1xf32> to vector<8x1xf32>
    %23 = vector.shape_cast %20 : vector<8x1xf32> to vector<1x8x1xf32>
    tpu.vector_store %arg5[%c1_15, %c0_16, %c0_17], %23 {strides = array<i32>} : memref<2x8x1xf32, #tpu.memory_space<vmem>>, vector<1x8x1xf32>,
    %c0_i32_18 = arith.constant 0 : i32
    %24 = arith.cmpi eq, %arg1, %c0_i32_18 : i32
    %25 = arith.extui %24 : i1 to i32
    %c0_i32_19 = arith.constant 0 : i32
    %26 = arith.cmpi ne, %25, %c0_i32_19 : i32
    scf.if %26 {
      %c0_20 = arith.constant 0 : index
      %c0_21 = arith.constant 0 : index
      %c0_22 = arith.constant 0 : index
      %27 = vector.load %arg5[%c0_20, %c0_21, %c0_22] : memref<2x8x1xf32, #tpu.memory_space<vmem>>, vector<2x8x1xf32>
      %c0_23 = arith.constant 0 : index
      %c0_24 = arith.constant 0 : index
      %c0_25 = arith.constant 0 : index
      %c0_26 = arith.constant 0 : index
      %28 = vector.load %arg4[%c0_23, %c0_24, %c0_25, %c0_26] : memref<1x2x8x1xf32, #tpu.memory_space<vmem>>, vector<1x2x8x1xf32>
      %29 = vector.shape_cast %28 : vector<1x2x8x1xf32> to vector<2x8x1xf32>
      %30 = vector.shape_cast %27 : vector<2x8x1xf32> to vector<1x2x8x1xf32>
      tpu.vector_store %arg4[%c0_23, %c0_24, %c0_25, %c0_26], %30 {strides = array<i32>} : memref<1x2x8x1xf32, #tpu.memory_space<vmem>>, vector<1x2x8x1xf32>,
    } else {
    }
    return
  }
  func.func @transform_0(%arg0: i32, %arg1: i32) -> (i32, i32, i32) {
    %c0_i32 = arith.constant 0 : i32
    %c0_i32_0 = arith.constant 0 : i32
    return %arg0, %c0_i32, %arg1 : i32, i32, i32
  }
  func.func @transform_1(%arg0: i32, %arg1: i32) -> (i32, i32) {
    %c0_i32 = arith.constant 0 : i32
    %c0_i32_0 = arith.constant 0 : i32
    %c0_i32_1 = arith.constant 0 : i32
    return %c0_i32, %c0_i32_0 : i32, i32
  }
  func.func @transform_2(%arg0: i32, %arg1: i32) -> (i32, i32, i32, i32) {
    %c0_i32 = arith.constant 0 : i32
    %c0_i32_0 = arith.constant 0 : i32
    %c0_i32_1 = arith.constant 0 : i32
    %c0_i32_2 = arith.constant 0 : i32
    return %arg0, %c0_i32, %c0_i32_0, %c0_i32_1 : i32, i32, i32, i32
  }
}

module attributes {stable_mosaic.version = 11 : i64} {
  func.func @_conv_bn_relu_kernel(%arg0: i32, %arg1: i32, %arg2: memref<1x36x256xbf16, #tpu.memory_space<vmem>>, %arg3: memref<8x36xbf16, #tpu.memory_space<vmem>>, %arg4: memref<2x8x1xf32, #tpu.memory_space<vmem>>, %arg5: memref<1x8x256xf32, #tpu.memory_space<vmem>>) attributes {dimension_semantics = [#tpu.dimension_semantics<parallel>, #tpu.dimension_semantics<parallel>], iteration_bounds = array<i64: 2, 1>, scalar_prefetch = 0 : i64, scratch_operands = 0 : i64, tpu.core_type = #tpu.core_type<tc>, window_params = [{transform_indices = @transform_0, window_bounds = array<i64: 1, 36, 256>}, {pipeline_mode = #tpu.pipeline_mode<synchronous>, transform_indices = @transform_1, window_bounds = array<i64: 8, 36>}, {pipeline_mode = #tpu.pipeline_mode<synchronous>, transform_indices = @transform_2, window_bounds = array<i64: 2, 8, 1>}, {transform_indices = @transform_3, window_bounds = array<i64: 1, 8, 256>}]} {
    %c0 = arith.constant 0 : index
    %c0_0 = arith.constant 0 : index
    %0 = vector.load %arg3[%c0, %c0_0] : memref<8x36xbf16, #tpu.memory_space<vmem>>, vector<8x36xbf16>
    %c0_1 = arith.constant 0 : index
    %c0_2 = arith.constant 0 : index
    %c0_3 = arith.constant 0 : index
    %1 = vector.load %arg2[%c0_1, %c0_2, %c0_3] : memref<1x36x256xbf16, #tpu.memory_space<vmem>>, vector<1x36x256xbf16>
    %2 = vector.shape_cast %1 : vector<1x36x256xbf16> to vector<36x256xbf16>
    %cst = arith.constant dense<0.000000e+00> : vector<8x256xf32>
    %3 = tpu.matmul %0, %2, %cst {dimension_numbers = #tpu.dot_dimension_numbers<[1], [0], [0], [1], [0, 0, 1, 1], [], []>} : vector<8x36xbf16>, vector<36x256xbf16>, vector<8x256xf32> -> vector<8x256xf32>
    %c0_4 = arith.constant 0 : index
    %c0_5 = arith.constant 0 : index
    %c0_6 = arith.constant 0 : index
    %4 = vector.load %arg4[%c0_4, %c0_5, %c0_6] : memref<2x8x1xf32, #tpu.memory_space<vmem>>, vector<1x8x1xf32>
    %5 = vector.shape_cast %4 : vector<1x8x1xf32> to vector<8x1xf32>
    %6 = vector.broadcast %5 : vector<8x1xf32> to vector<8x256xf32>
    %7 = arith.mulf %3, %6 : vector<8x256xf32>
    %c1 = arith.constant 1 : index
    %c0_7 = arith.constant 0 : index
    %c0_8 = arith.constant 0 : index
    %8 = vector.load %arg4[%c1, %c0_7, %c0_8] : memref<2x8x1xf32, #tpu.memory_space<vmem>>, vector<1x8x1xf32>
    %9 = vector.shape_cast %8 : vector<1x8x1xf32> to vector<8x1xf32>
    %10 = vector.broadcast %9 : vector<8x1xf32> to vector<8x256xf32>
    %11 = arith.addf %7, %10 : vector<8x256xf32>
    %cst_9 = arith.constant 0.000000e+00 : f32
    %12 = vector.broadcast %cst_9 : f32 to vector<8x256xf32>
    %13 = arith.maximumf %11, %12 : vector<8x256xf32>
    %c0_10 = arith.constant 0 : index
    %c0_11 = arith.constant 0 : index
    %c0_12 = arith.constant 0 : index
    %14 = vector.load %arg5[%c0_10, %c0_11, %c0_12] : memref<1x8x256xf32, #tpu.memory_space<vmem>>, vector<1x8x256xf32>
    %15 = vector.shape_cast %14 : vector<1x8x256xf32> to vector<8x256xf32>
    %16 = vector.shape_cast %13 : vector<8x256xf32> to vector<1x8x256xf32>
    tpu.vector_store %arg5[%c0_10, %c0_11, %c0_12], %16 {strides = array<i32>} : memref<1x8x256xf32, #tpu.memory_space<vmem>>, vector<1x8x256xf32>,
    return
  }
  func.func @transform_0(%arg0: i32, %arg1: i32) -> (i32, i32, i32) {
    %c0_i32 = arith.constant 0 : i32
    %c0_i32_0 = arith.constant 0 : i32
    return %arg0, %c0_i32, %arg1 : i32, i32, i32
  }
  func.func @transform_1(%arg0: i32, %arg1: i32) -> (i32, i32) {
    %c0_i32 = arith.constant 0 : i32
    %c0_i32_0 = arith.constant 0 : i32
    %c0_i32_1 = arith.constant 0 : i32
    return %c0_i32, %c0_i32_0 : i32, i32
  }
  func.func @transform_2(%arg0: i32, %arg1: i32) -> (i32, i32, i32) {
    %c0_i32 = arith.constant 0 : i32
    %c0_i32_0 = arith.constant 0 : i32
    %c0_i32_1 = arith.constant 0 : i32
    %c0_i32_2 = arith.constant 0 : i32
    return %c0_i32, %c0_i32_0, %c0_i32_1 : i32, i32, i32
  }
  func.func @transform_3(%arg0: i32, %arg1: i32) -> (i32, i32, i32) {
    %c0_i32 = arith.constant 0 : i32
    %c0_i32_0 = arith.constant 0 : i32
    return %arg0, %c0_i32, %arg1 : i32, i32, i32
  }
}

</mosaic_0001>

<llo_original>
// kernel: conv2d_bn_relu.2
$region0: #{conv2d_bn_relu.2}
  #allocation0 [shape = 'u32[]', space=smem, size = 0x4, offset = 0x4, fixed_abs, tag = 'smem constant byte address 0x4 - core index']
  #allocation1 [shape = 'u32[72,128]{1,0:T(1,128)}', space=vmem, size = 0x9000, scoped, tag = 'internal scratch']
  #allocation2 [shape = 'f32[2,8,1]{2,1,0:T(8,128)}', space=vmem, size = 0x2000, scoped, tag = 'scratch operand']
  %s0 = inlined_call_operand.vmem [shape: bf16[2,36,256], index: 0, kind: input, shape index: {}]
  %s1 = inlined_call_operand.vmem [shape: bf16[8,36], index: 1, kind: input, shape index: {}]
  %s2 = inlined_call_operand.vmem [shape: f32[2,2,8,1], index: 2, kind: output, shape index: {}]
  %s3 = sld [smem:[#allocation0]]
  $region49: #{conv2d_bn_relu.2} parent=0
    _
  %s5 = ssub.s32 1, %s3
  %s6 = scalar_select 0, %s5, %s3
  loop: start=0, step=1, limit=4
  $region2: #{conv2d_bn_relu.2} parent=0 // loop_pre_header
    _
  $region3: #{conv2d_bn_relu.2} parent=0 // loop_header
    %s8 = sphi 0, %s12
    %p9 = scmp.ge.s32.totalorder %s8, 4
    %s15 = sphi 0, %s27
    %s16 = sphi 0, %s23
    %s17 = sphi 0, %s15
    %s18 = sphi 0, %s16
    %s19 = sphi 0, %s17
    %s20 = sphi 0, %s18
    %s32 = sphi 0, %s34
    %s35 = sphi 0, %s32
    %s36 = sphi 0, %s35
    %s52 = sphi 0, %s36
    %s56 = sphi 0, %s56
    %s58 = sphi 0, %s56
    %s59 = sphi 0, %s58
    %s73 = sphi 0, %s59
    %s79 = sphi 0, %s81
    %s82 = sphi 0, %s79
    %s83 = sphi 0, %s82
    %s99 = sphi 0, %s83
  $region4: #{conv2d_bn_relu.2} parent=0 // loop_header_branch
    %11 = sbr.rel (%p9) target = $region8
  $region5: #{conv2d_bn_relu.2} parent=0 // loop_body
    %s13 = ssub.s32 %s8, 1
    %s14 = ssub.s32 %s8, 2
    %s21 = sadd.s32 1, %s16
    %p22 = scmp.ge.s32.totalorder %s21, 1
    %s23 = scalar_select %p22, 0, %s21
    %s24 = sadd.s32 1, %s15
    %s25 = scalar_select %p22, %s24, %s15
    %p26 = scmp.ge.s32.totalorder %s25, 2
    %s27 = scalar_select %p26, 0, %s25
    %s28 = ssub.s32 %s15, %s27
    %s29 = ssub.s32 %s16, %s23
    %s30 = sor.u32 %s28, %s29
    %p31 = scmp.eq.s32.totalorder %s30, 0
    %s33 = sadd.s32 %s32, 1
    %s34 = scalar_select %p31, %s32, %s33
    %p37 = pneg %p31
    %p38 = scmp.eq.s32.totalorder %s8, 1
    %p39 = por %p37, %p38
    %p40 = scmp.ne.s32.totalorder %s32, %s35
    %p41 = scmp.eq.s32.totalorder %s8, 0
    %p42 = por %p40, %p41
    %p43 = scmp.ne.s32.totalorder %s32, %s35
    %p44 = scmp.eq.s32.totalorder %s13, 1
    %p45 = por %p43, %p44
    %p46 = scmp.ne.s32.totalorder %s35, %s36
    %p47 = scmp.eq.s32.totalorder %s13, 0
    %p48 = por %p46, %p47
    %p49 = scmp.ne.s32.totalorder %s35, %s36
    %p50 = scmp.eq.s32.totalorder %s14, 1
    %p51 = por %p49, %p50
    %p53 = scmp.ne.s32.totalorder %s36, %s52
    %p54 = scmp.eq.s32.totalorder %s14, 0
    %p55 = por %p53, %p54
    %s57 = sadd.s32 %s56, 1
    %p60 = scmp.eq.s32.totalorder %s8, 1
    %p61 = scmp.ne.s32.totalorder %s56, %s58
    %p62 = scmp.eq.s32.totalorder %s8, 0
    %p63 = por %p61, %p62
    %p64 = scmp.ne.s32.totalorder %s56, %s58
    %p65 = scmp.eq.s32.totalorder %s13, 1
    %p66 = por %p64, %p65
    %p67 = scmp.ne.s32.totalorder %s58, %s59
    %p68 = scmp.eq.s32.totalorder %s13, 0
    %p69 = por %p67, %p68
    %p70 = scmp.ne.s32.totalorder %s58, %s59
    %p71 = scmp.eq.s32.totalorder %s14, 1
    %p72 = por %p70, %p71
    %p74 = scmp.ne.s32.totalorder %s59, %s73
    %p75 = scmp.eq.s32.totalorder %s14, 0
    %p76 = por %p74, %p75
    %s77 = ssub.s32 %s15, %s27
    %p78 = scmp.eq.s32.totalorder %s77, 0
    %s80 = sadd.s32 %s79, 1
    %s81 = scalar_select %p78, %s79, %s80
    %p84 = pneg %p78
    %p85 = scmp.eq.s32.totalorder %s8, 1
    %p86 = por %p84, %p85
    %p87 = scmp.ne.s32.totalorder %s79, %s82
    %p88 = scmp.eq.s32.totalorder %s8, 0
    %p89 = por %p87, %p88
    %p90 = scmp.ne.s32.totalorder %s79, %s82
    %p91 = scmp.eq.s32.totalorder %s13, 1
    %p92 = por %p90, %p91
    %p93 = scmp.ne.s32.totalorder %s82, %s83
    %p94 = scmp.eq.s32.totalorder %s13, 0
    %p95 = por %p93, %p94
    %p96 = scmp.ne.s32.totalorder %s82, %s83
    %p97 = scmp.eq.s32.totalorder %s14, 1
    %p98 = por %p96, %p97
    %p100 = scmp.ne.s32.totalorder %s83, %s99
    %p101 = scmp.eq.s32.totalorder %s14, 0
    %p102 = por %p100, %p101
    %p103 = scmp.le.s32.totalorder 1, %s8
    %p104 = scmp.lt.s32.totalorder %s8, 3
    %p105 = pnand %p103, %p104
    %p106 = pneg %p105
    // Predicated region
    $region9: #{conv2d_bn_relu.2} parent=5 // pred_check
      _
    $region10: #{conv2d_bn_relu.2} parent=5 // pred_check_branch
      %108 = sbr.rel (%p105) target = $region12
    $region11: #{conv2d_bn_relu.2} parent=5 // pred_region
      %s109 = ssub.s32 %s8, 1
      // Predicated region
      $region13: #{conv2d_bn_relu.2} parent=11 // pred_check
        %p110 = pneg %p69
      $region14: #{conv2d_bn_relu.2} parent=11 // pred_check_branch
        %112 = sbr.rel (%p110) target = $region16
      $region15: #{conv2d_bn_relu.2} parent=11 // pred_region
        _
      $region16: #{conv2d_bn_relu.2} parent=11 // pred_fallthru
        _
    $region12: #{conv2d_bn_relu.2} parent=5 // pred_fallthru
      _
    %p113 = scmp.lt.s32.totalorder %s8, 2
    // Predicated region
    $region17: #{conv2d_bn_relu.2} parent=5 // pred_check
      %p114 = pneg %p113
    $region18: #{conv2d_bn_relu.2} parent=5 // pred_check_branch
      %116 = sbr.rel (%p114) target = $region20
    $region19: #{conv2d_bn_relu.2} parent=5 // pred_region
      // Predicated region
      $region21: #{conv2d_bn_relu.2} parent=19 // pred_check
        %p117 = pneg %p42
      $region22: #{conv2d_bn_relu.2} parent=19 // pred_check_branch
        %119 = sbr.rel (%p117) target = $region24
      $region23: #{conv2d_bn_relu.2} parent=19 // pred_region
        %s120 = smul.u32 2, %s16
        %p121 = scmp.lt.s32.totalorder %s15, 1
        %s122 = scalar_select %p121, %s15, 1
        %p123 = scmp.lt.s32.totalorder %s120, 1
        %s124 = scalar_select %p123, %s120, 1
        %s125 = smul.addr %s122, 10
        %s126 = sadd.s32 %s124, %s125
        %s127 = smul.addr %s126, 4
        %s128 = scalar_lea.vmem %s0, %s127
        %s129 = smul.u32 2, %s16
      $region24: #{conv2d_bn_relu.2} parent=19 // pred_fallthru
        _
    $region20: #{conv2d_bn_relu.2} parent=5 // pred_fallthru
      _
    %p130 = scmp.le.s32.totalorder 1, %s8
    %p131 = scmp.lt.s32.totalorder %s8, 3
    %p132 = pnand %p130, %p131
    %p133 = pneg %p132
    // Predicated region
    $region25: #{conv2d_bn_relu.2} parent=5 // pred_check
      _
    $region26: #{conv2d_bn_relu.2} parent=5 // pred_check_branch
      %135 = sbr.rel (%p132) target = $region28
    $region27: #{conv2d_bn_relu.2} parent=5 // pred_region
      %s136 = ssub.s32 %s8, 1
      %s137 = smul.u32 2, %s18
      %p138 = scmp.lt.s32.totalorder %s17, 1
      %s139 = scalar_select %p138, %s17, 1
      %p140 = scmp.lt.s32.totalorder %s137, 1
      %s141 = scalar_select %p140, %s137, 1
      %s142 = smul.addr %s139, 10
      %s143 = sadd.s32 %s141, %s142
      %s144 = smul.addr %s143, 4
      %s145 = scalar_lea.vmem %s0, %s144
      %p146 = pneg %p48
      %p147 = pneg %p45
      %p148 = pneg %p69
      %p149 = pneg %p66
      %p150 = pneg %p95
      %p151 = pneg %p92
      %p152 = scmp.lt.s32.totalorder %s17, 1
      %s153 = scalar_select %p152, %s17, 1
      %s154 = smul.addr %s153, 2
      %s155 = smul.addr %s154, 8
      %s156 = scalar_lea.vmem %s2, %s155
      %s157 = smul.u32 2, %s18
      %p158 = scmp.lt.s32.totalorder %s17, 1
      %s159 = scalar_select %p158, %s17, 1
      %p160 = scmp.lt.s32.totalorder %s157, 1
      %s161 = scalar_select %p160, %s157, 1
      %s162 = smul.addr %s159, 10
      %s163 = sadd.s32 %s161, %s162
      %s164 = smul.addr %s163, 4
      %s165 = scalar_lea.vmem %s0, %s164
      %s166 = smul.u32 2, %s18
      %p167 = scmp.lt.s32.totalorder %s17, 1
      %s168 = scalar_select %p167, %s17, 1
      %s169 = smul.addr %s168, 2
      %s170 = smul.addr %s169, 8
      %s171 = scalar_lea.vmem %s2, %s170
      %v173 = vld [vmem:[%s1] sm:$0xf]
      %v174 = vld [vmem:[%s165] sm:$0xff]
      %v175 = vld [vmem:[%s165 + $0x8] sm:$0xff]
      %v176 = vld [vmem:[%s165 + $0x10] sm:$0xff]
      %v177 = vld [vmem:[%s165 + $0x18] sm:$0xff]
      %v178 = vld [vmem:[%s165 + $0x20] sm:$0x33]
      %v184 = vunpack.c.l.b16 %v174
      %v185 = vunpack.c.h.b16 %v174
      %v186 = vunpack.c.l.b16 %v175
      %v187 = vunpack.c.h.b16 %v175
      %v188 = vunpack.c.l.b16 %v176
      %v189 = vunpack.c.h.b16 %v176
      %v190 = vunpack.c.l.b16 %v177
      %v191 = vunpack.c.h.b16 %v177
      %v192 = vunpack.c.l.b16 %v178
      %v193 = vunpack.c.h.b16 %v178
      %v194 = vpack.c.b16 %v186, %v184
      %v195 = vpack.c.b16 %v187, %v185
      %v196 = vpack.c.b16 %v190, %v188
      %v197 = vpack.c.b16 %v191, %v189
      %v198 = vpack.c.b16 %v192, %v192
      %v199 = vpack.c.b16 %v193, %v193
      %vm204 = vcmask 293888
      %v206 = vsel %vm204, %v173, 0
      %vm208 = vcmask 1041408
      %v210 = vsel %vm208, %v198, 0
      %v213 = vsel %vm208, %v199, 0
      %215 = vmatpush.bf16.msra.mxu0 0
      %216 = vmatpush.bf16.msra.mxu0 0
      %217 = vmatpush.bf16.msra.mxu0 0
      %218 = vmatpush.bf16.msra.mxu0 0
      %219 = vmatpush.bf16.msra.mxu0 0
      %220 = vmatpush.bf16.msra.mxu0 %v210
      %221 = vmatpush.bf16.msra.mxu0 %v196
      %222 = vmatpush.bf16.msra.mxu0 %v194
      %223 = vmatmul.bf16.gmra.mxu0 %v206
      %v224 = vpop.f32.mrf.mxu0
      %v225 = vadd.f32 0.0, %v224
      %v226 = vpop.f32.mrf.mxu0
      %227 = vdwg.mxu0
      %228 = vmatpush.bf16.msra.mxu0 0
      %229 = vmatpush.bf16.msra.mxu0 0
      %230 = vmatpush.bf16.msra.mxu0 0
      %231 = vmatpush.bf16.msra.mxu0 0
      %232 = vmatpush.bf16.msra.mxu0 0
      %233 = vmatpush.bf16.msra.mxu0 %v213
      %234 = vmatpush.bf16.msra.mxu0 %v197
      %235 = vmatpush.bf16.msra.mxu0 %v195
      %236 = vmatmul.bf16.gmra.mxu0 %v206
      %v237 = vpop.f32.mrf.mxu0
      %v238 = vadd.f32 0.0, %v237
      %v239 = vpop.f32.mrf.mxu0
      %240 = vdwg.mxu0
      %p241 = scmp.eq.s32.totalorder %s18, 0
      // Predicated region
      $region29: #{conv2d_bn_relu.2} parent=27 // pred_check
        %p242 = pneg %p241
      $region30: #{conv2d_bn_relu.2} parent=27 // pred_check_branch
        %244 = sbr.rel (%p242) target = $region32
      $region31: #{conv2d_bn_relu.2} parent=27 // pred_region
        %vm245 = vcmask 7168
        %246 = vst.msk [vmem:[#allocation2] sm:$0xff] %vm245, 0.0
        %247 = vst.msk [vmem:[#allocation2 + $0x8] sm:$0xff] %vm245, 0.0
      $region32: #{conv2d_bn_relu.2} parent=27 // pred_fallthru
        _
      %v248 = vld [vmem:[#allocation2] sm:$0xff]
      %v249 = vadd.f32 %v225, %v238
      %250 = vadd.xlane.f32.xlu0 %v249
      %v251 = vpop.xlane.xlu0 %250
      %v252 = vadd.f32 %v248, %v251
      %vm253 = vcmask 7168
      %254 = vst.msk [vmem:[#allocation2] sm:$0xff] %vm253, %v252
      %s255 = scalar_lea.vmem [#allocation2], 8
      %v256 = vld [vmem:[%s255] sm:$0xff]
      %v257 = vmul.f32 %v225, %v225
      %v258 = vmul.f32 %v238, %v238
      %v259 = vadd.f32 %v257, %v258
      %260 = vadd.xlane.f32.xlu0 %v259
      %v261 = vpop.xlane.xlu0 %260
      %v262 = vadd.f32 %v256, %v261
      %263 = vst.msk [vmem:[%s255] sm:$0xff] %vm253, %v262
      // Predicated region
      $region33: #{conv2d_bn_relu.2} parent=27 // pred_check
        %p264 = pneg %p241
      $region34: #{conv2d_bn_relu.2} parent=27 // pred_check_branch
        %266 = sbr.rel (%p264) target = $region36
      $region35: #{conv2d_bn_relu.2} parent=27 // pred_region
        %v267 = vld [vmem:[#allocation2] sm:$0xff]
        %v268 = vld [vmem:[#allocation2 + $0x8] sm:$0xff]
        %269 = vst.msk [vmem:[%s171] sm:$0xff] %vm253, %v267
        %270 = vst.msk [vmem:[%s171 + $0x8] sm:$0xff] %vm253, %v268
      $region36: #{conv2d_bn_relu.2} parent=27 // pred_fallthru
        _
      %p271 = scmp.lt.s32.totalorder %s17, 1
      %s272 = scalar_select %p271, %s17, 1
      %s273 = smul.addr %s272, 2
      %s274 = smul.addr %s273, 8
      %s275 = scalar_lea.vmem %s2, %s274
      // Predicated region
      $region37: #{conv2d_bn_relu.2} parent=27 // pred_check
        %p276 = pneg %p92
      $region38: #{conv2d_bn_relu.2} parent=27 // pred_check_branch
        %278 = sbr.rel (%p276) target = $region40
      $region39: #{conv2d_bn_relu.2} parent=27 // pred_region
        _
      $region40: #{conv2d_bn_relu.2} parent=27 // pred_fallthru
        _
    $region28: #{conv2d_bn_relu.2} parent=5 // pred_fallthru
      _
    %p279 = scmp.le.s32.totalorder 2, %s8
    // Predicated region
    $region41: #{conv2d_bn_relu.2} parent=5 // pred_check
      %p280 = pneg %p279
    $region42: #{conv2d_bn_relu.2} parent=5 // pred_check_branch
      %282 = sbr.rel (%p280) target = $region44
    $region43: #{conv2d_bn_relu.2} parent=5 // pred_region
      %s283 = ssub.s32 %s8, 2
      // Predicated region
      $region45: #{conv2d_bn_relu.2} parent=43 // pred_check
        %p284 = pneg %p98
      $region46: #{conv2d_bn_relu.2} parent=43 // pred_check_branch
        %286 = sbr.rel (%p284) target = $region48
      $region47: #{conv2d_bn_relu.2} parent=43 // pred_region
        %p287 = scmp.lt.s32.totalorder %s19, 1
        %s288 = scalar_select %p287, %s19, 1
        %s289 = smul.addr %s288, 2
        %s290 = smul.addr %s289, 8
        %s291 = scalar_lea.vmem %s2, %s290
      $region48: #{conv2d_bn_relu.2} parent=43 // pred_fallthru
        _
    $region44: #{conv2d_bn_relu.2} parent=5 // pred_fallthru
      _
  $region6: #{conv2d_bn_relu.2} parent=0 // loop_footer
    %s12 = sadd.s32 1, %s8
  $region7: #{conv2d_bn_relu.2} parent=0 // loop_footer_branch
    %7 = sbr.rel target = $region3
  $region8: #{conv2d_bn_relu.2} parent=0 // loop_exit
    _

// kernel: conv2d_bn_relu.3
$region0: #{conv2d_bn_relu.3}
  #allocation0 [shape = 'u32[]', space=smem, size = 0x4, offset = 0x4, fixed_abs, tag = 'smem constant byte address 0x4 - core index']
  #allocation1 [shape = 'u32[72,128]{1,0:T(1,128)}', space=vmem, size = 0x9000, scoped, tag = 'internal scratch']
  %s0 = inlined_call_operand.vmem [shape: bf16[2,36,256], index: 0, kind: input, shape index: {}]
  %s1 = inlined_call_operand.vmem [shape: bf16[8,36], index: 1, kind: input, shape index: {}]
  %s2 = inlined_call_operand.vmem [shape: f32[2,8,1], index: 2, kind: input, shape index: {}]
  %s3 = inlined_call_operand.vmem [shape: f32[2,8,256], index: 3, kind: output, shape index: {}]
  %s4 = sld [smem:[#allocation0]]
  $region45: #{conv2d_bn_relu.3} parent=0
    _
  %s6 = ssub.s32 1, %s4
  %s7 = scalar_select 0, %s6, %s4
  loop: start=0, step=1, limit=4
  $region2: #{conv2d_bn_relu.3} parent=0 // loop_pre_header
    _
  $region3: #{conv2d_bn_relu.3} parent=0 // loop_header
    %s9 = sphi 0, %s13
    %p10 = scmp.ge.s32.totalorder %s9, 4
    %s16 = sphi 0, %s28
    %s17 = sphi 0, %s24
    %s18 = sphi 0, %s16
    %s19 = sphi 0, %s17
    %s20 = sphi 0, %s18
    %s21 = sphi 0, %s19
    %s33 = sphi 0, %s35
    %s36 = sphi 0, %s33
    %s37 = sphi 0, %s36
    %s53 = sphi 0, %s37
    %s57 = sphi 0, %s57
    %s59 = sphi 0, %s57
    %s60 = sphi 0, %s59
    %s74 = sphi 0, %s60
    %s78 = sphi 0, %s78
    %s80 = sphi 0, %s78
    %s81 = sphi 0, %s80
    %s95 = sphi 0, %s81
    %s103 = sphi 0, %s105
    %s106 = sphi 0, %s103
    %s107 = sphi 0, %s106
    %s123 = sphi 0, %s107
  $region4: #{conv2d_bn_relu.3} parent=0 // loop_header_branch
    %12 = sbr.rel (%p10) target = $region8
  $region5: #{conv2d_bn_relu.3} parent=0 // loop_body
    %s14 = ssub.s32 %s9, 1
    %s15 = ssub.s32 %s9, 2
    %s22 = sadd.s32 1, %s17
    %p23 = scmp.ge.s32.totalorder %s22, 1
    %s24 = scalar_select %p23, 0, %s22
    %s25 = sadd.s32 1, %s16
    %s26 = scalar_select %p23, %s25, %s16
    %p27 = scmp.ge.s32.totalorder %s26, 2
    %s28 = scalar_select %p27, 0, %s26
    %s29 = ssub.s32 %s16, %s28
    %s30 = ssub.s32 %s17, %s24
    %s31 = sor.u32 %s29, %s30
    %p32 = scmp.eq.s32.totalorder %s31, 0
    %s34 = sadd.s32 %s33, 1
    %s35 = scalar_select %p32, %s33, %s34
    %p38 = pneg %p32
    %p39 = scmp.eq.s32.totalorder %s9, 1
    %p40 = por %p38, %p39
    %p41 = scmp.ne.s32.totalorder %s33, %s36
    %p42 = scmp.eq.s32.totalorder %s9, 0
    %p43 = por %p41, %p42
    %p44 = scmp.ne.s32.totalorder %s33, %s36
    %p45 = scmp.eq.s32.totalorder %s14, 1
    %p46 = por %p44, %p45
    %p47 = scmp.ne.s32.totalorder %s36, %s37
    %p48 = scmp.eq.s32.totalorder %s14, 0
    %p49 = por %p47, %p48
    %p50 = scmp.ne.s32.totalorder %s36, %s37
    %p51 = scmp.eq.s32.totalorder %s15, 1
    %p52 = por %p50, %p51
    %p54 = scmp.ne.s32.totalorder %s37, %s53
    %p55 = scmp.eq.s32.totalorder %s15, 0
    %p56 = por %p54, %p55
    %s58 = sadd.s32 %s57, 1
    %p61 = scmp.eq.s32.totalorder %s9, 1
    %p62 = scmp.ne.s32.totalorder %s57, %s59
    %p63 = scmp.eq.s32.totalorder %s9, 0
    %p64 = por %p62, %p63
    %p65 = scmp.ne.s32.totalorder %s57, %s59
    %p66 = scmp.eq.s32.totalorder %s14, 1
    %p67 = por %p65, %p66
    %p68 = scmp.ne.s32.totalorder %s59, %s60
    %p69 = scmp.eq.s32.totalorder %s14, 0
    %p70 = por %p68, %p69
    %p71 = scmp.ne.s32.totalorder %s59, %s60
    %p72 = scmp.eq.s32.totalorder %s15, 1
    %p73 = por %p71, %p72
    %p75 = scmp.ne.s32.totalorder %s60, %s74
    %p76 = scmp.eq.s32.totalorder %s15, 0
    %p77 = por %p75, %p76
    %s79 = sadd.s32 %s78, 1
    %p82 = scmp.eq.s32.totalorder %s9, 1
    %p83 = scmp.ne.s32.totalorder %s78, %s80
    %p84 = scmp.eq.s32.totalorder %s9, 0
    %p85 = por %p83, %p84
    %p86 = scmp.ne.s32.totalorder %s78, %s80
    %p87 = scmp.eq.s32.totalorder %s14, 1
    %p88 = por %p86, %p87
    %p89 = scmp.ne.s32.totalorder %s80, %s81
    %p90 = scmp.eq.s32.totalorder %s14, 0
    %p91 = por %p89, %p90
    %p92 = scmp.ne.s32.totalorder %s80, %s81
    %p93 = scmp.eq.s32.totalorder %s15, 1
    %p94 = por %p92, %p93
    %p96 = scmp.ne.s32.totalorder %s81, %s95
    %p97 = scmp.eq.s32.totalorder %s15, 0
    %p98 = por %p96, %p97
    %s99 = ssub.s32 %s16, %s28
    %s100 = ssub.s32 %s17, %s24
    %s101 = sor.u32 %s99, %s100
    %p102 = scmp.eq.s32.totalorder %s101, 0
    %s104 = sadd.s32 %s103, 1
    %s105 = scalar_select %p102, %s103, %s104
    %p108 = pneg %p102
    %p109 = scmp.eq.s32.totalorder %s9, 1
    %p110 = por %p108, %p109
    %p111 = scmp.ne.s32.totalorder %s103, %s106
    %p112 = scmp.eq.s32.totalorder %s9, 0
    %p113 = por %p111, %p112
    %p114 = scmp.ne.s32.totalorder %s103, %s106
    %p115 = scmp.eq.s32.totalorder %s14, 1
    %p116 = por %p114, %p115
    %p117 = scmp.ne.s32.totalorder %s106, %s107
    %p118 = scmp.eq.s32.totalorder %s14, 0
    %p119 = por %p117, %p118
    %p120 = scmp.ne.s32.totalorder %s106, %s107
    %p121 = scmp.eq.s32.totalorder %s15, 1
    %p122 = por %p120, %p121
    %p124 = scmp.ne.s32.totalorder %s107, %s123
    %p125 = scmp.eq.s32.totalorder %s15, 0
    %p126 = por %p124, %p125
    %p127 = scmp.le.s32.totalorder 1, %s9
    %p128 = scmp.lt.s32.totalorder %s9, 3
    %p129 = pnand %p127, %p128
    %p130 = pneg %p129
    // Predicated region
    $region9: #{conv2d_bn_relu.3} parent=5 // pred_check
      _
    $region10: #{conv2d_bn_relu.3} parent=5 // pred_check_branch
      %132 = sbr.rel (%p129) target = $region12
    $region11: #{conv2d_bn_relu.3} parent=5 // pred_region
      %s133 = ssub.s32 %s9, 1
      // Predicated region
      $region13: #{conv2d_bn_relu.3} parent=11 // pred_check
        %p134 = pneg %p70
      $region14: #{conv2d_bn_relu.3} parent=11 // pred_check_branch
        %136 = sbr.rel (%p134) target = $region16
      $region15: #{conv2d_bn_relu.3} parent=11 // pred_region
        _
      $region16: #{conv2d_bn_relu.3} parent=11 // pred_fallthru
        _
      // Predicated region
      $region17: #{conv2d_bn_relu.3} parent=11 // pred_check
        %p137 = pneg %p91
      $region18: #{conv2d_bn_relu.3} parent=11 // pred_check_branch
        %139 = sbr.rel (%p137) target = $region20
      $region19: #{conv2d_bn_relu.3} parent=11 // pred_region
        _
      $region20: #{conv2d_bn_relu.3} parent=11 // pred_fallthru
        _
    $region12: #{conv2d_bn_relu.3} parent=5 // pred_fallthru
      _
    %p140 = scmp.lt.s32.totalorder %s9, 2
    // Predicated region
    $region21: #{conv2d_bn_relu.3} parent=5 // pred_check
      %p141 = pneg %p140
    $region22: #{conv2d_bn_relu.3} parent=5 // pred_check_branch
      %143 = sbr.rel (%p141) target = $region24
    $region23: #{conv2d_bn_relu.3} parent=5 // pred_region
      // Predicated region
      $region25: #{conv2d_bn_relu.3} parent=23 // pred_check
        %p144 = pneg %p43
      $region26: #{conv2d_bn_relu.3} parent=23 // pred_check_branch
        %146 = sbr.rel (%p144) target = $region28
      $region27: #{conv2d_bn_relu.3} parent=23 // pred_region
        %s147 = smul.u32 2, %s17
        %p148 = scmp.lt.s32.totalorder %s16, 1
        %s149 = scalar_select %p148, %s16, 1
        %p150 = scmp.lt.s32.totalorder %s147, 1
        %s151 = scalar_select %p150, %s147, 1
        %s152 = smul.addr %s149, 10
        %s153 = sadd.s32 %s151, %s152
        %s154 = smul.addr %s153, 4
        %s155 = scalar_lea.vmem %s0, %s154
        %s156 = smul.u32 2, %s17
      $region28: #{conv2d_bn_relu.3} parent=23 // pred_fallthru
        _
    $region24: #{conv2d_bn_relu.3} parent=5 // pred_fallthru
      _
    %p157 = scmp.le.s32.totalorder 1, %s9
    %p158 = scmp.lt.s32.totalorder %s9, 3
    %p159 = pnand %p157, %p158
    %p160 = pneg %p159
    // Predicated region
    $region29: #{conv2d_bn_relu.3} parent=5 // pred_check
      _
    $region30: #{conv2d_bn_relu.3} parent=5 // pred_check_branch
      %162 = sbr.rel (%p159) target = $region32
    $region31: #{conv2d_bn_relu.3} parent=5 // pred_region
      %s163 = ssub.s32 %s9, 1
      %s164 = smul.u32 2, %s19
      %p165 = scmp.lt.s32.totalorder %s18, 1
      %s166 = scalar_select %p165, %s18, 1
      %p167 = scmp.lt.s32.totalorder %s164, 1
      %s168 = scalar_select %p167, %s164, 1
      %s169 = smul.addr %s166, 10
      %s170 = sadd.s32 %s168, %s169
      %s171 = smul.addr %s170, 4
      %s172 = scalar_lea.vmem %s0, %s171
      %p173 = pneg %p49
      %p174 = pneg %p46
      %p175 = pneg %p70
      %p176 = pneg %p67
      %p177 = pneg %p91
      %p178 = pneg %p88
      %p179 = pneg %p119
      %p180 = pneg %p116
      %s181 = smul.u32 2, %s19
      %p182 = scmp.lt.s32.totalorder %s18, 1
      %s183 = scalar_select %p182, %s18, 1
      %p184 = scmp.lt.s32.totalorder %s181, 1
      %s185 = scalar_select %p184, %s181, 1
      %s186 = smul.addr %s183, 2
      %s187 = sadd.s32 %s185, %s186
      %s188 = smul.addr %s187, 8
      %s189 = scalar_lea.vmem %s3, %s188
      %s190 = smul.u32 2, %s19
      %p191 = scmp.lt.s32.totalorder %s18, 1
      %s192 = scalar_select %p191, %s18, 1
      %p193 = scmp.lt.s32.totalorder %s190, 1
      %s194 = scalar_select %p193, %s190, 1
      %s195 = smul.addr %s192, 10
      %s196 = sadd.s32 %s194, %s195
      %s197 = smul.addr %s196, 4
      %s198 = scalar_lea.vmem %s0, %s197
      %s199 = smul.u32 2, %s19
      %s200 = smul.u32 2, %s19
      %p201 = scmp.lt.s32.totalorder %s18, 1
      %s202 = scalar_select %p201, %s18, 1
      %p203 = scmp.lt.s32.totalorder %s200, 1
      %s204 = scalar_select %p203, %s200, 1
      %s205 = smul.addr %s202, 2
      %s206 = sadd.s32 %s204, %s205
      %s207 = smul.addr %s206, 8
      %s208 = scalar_lea.vmem %s3, %s207
      %s209 = smul.u32 2, %s19
      %v211 = vld [vmem:[%s1] sm:$0xf]
      %v212 = vld [vmem:[%s198] sm:$0xff]
      %v213 = vld [vmem:[%s198 + $0x8] sm:$0xff]
      %v214 = vld [vmem:[%s198 + $0x10] sm:$0xff]
      %v215 = vld [vmem:[%s198 + $0x18] sm:$0xff]
      %v216 = vld [vmem:[%s198 + $0x20] sm:$0x33]
      %v222 = vunpack.c.l.b16 %v212
      %v223 = vunpack.c.h.b16 %v212
      %v224 = vunpack.c.l.b16 %v213
      %v225 = vunpack.c.h.b16 %v213
      %v226 = vunpack.c.l.b16 %v214
      %v227 = vunpack.c.h.b16 %v214
      %v228 = vunpack.c.l.b16 %v215
      %v229 = vunpack.c.h.b16 %v215
      %v230 = vunpack.c.l.b16 %v216
      %v231 = vunpack.c.h.b16 %v216
      %v232 = vpack.c.b16 %v224, %v222
      %v233 = vpack.c.b16 %v225, %v223
      %v234 = vpack.c.b16 %v228, %v226
      %v235 = vpack.c.b16 %v229, %v227
      %v236 = vpack.c.b16 %v230, %v230
      %v237 = vpack.c.b16 %v231, %v231
      %vm242 = vcmask 293888
      %v244 = vsel %vm242, %v211, 0
      %vm246 = vcmask 1041408
      %v248 = vsel %vm246, %v236, 0
      %v251 = vsel %vm246, %v237, 0
      %253 = vmatpush.bf16.msra.mxu0 0
      %254 = vmatpush.bf16.msra.mxu0 0
      %255 = vmatpush.bf16.msra.mxu0 0
      %256 = vmatpush.bf16.msra.mxu0 0
      %257 = vmatpush.bf16.msra.mxu0 0
      %258 = vmatpush.bf16.msra.mxu0 %v248
      %259 = vmatpush.bf16.msra.mxu0 %v234
      %260 = vmatpush.bf16.msra.mxu0 %v232
      %261 = vmatmul.bf16.gmra.mxu0 %v244
      %v262 = vpop.f32.mrf.mxu0
      %v263 = vadd.f32 0.0, %v262
      %v264 = vpop.f32.mrf.mxu0
      %265 = vdwg.mxu0
      %266 = vmatpush.bf16.msra.mxu0 0
      %267 = vmatpush.bf16.msra.mxu0 0
      %268 = vmatpush.bf16.msra.mxu0 0
      %269 = vmatpush.bf16.msra.mxu0 0
      %270 = vmatpush.bf16.msra.mxu0 0
      %271 = vmatpush.bf16.msra.mxu0 %v251
      %272 = vmatpush.bf16.msra.mxu0 %v235
      %273 = vmatpush.bf16.msra.mxu0 %v233
      %274 = vmatmul.bf16.gmra.mxu0 %v244
      %v275 = vpop.f32.mrf.mxu0
      %v276 = vadd.f32 0.0, %v275
      %v277 = vpop.f32.mrf.mxu0
      %278 = vdwg.mxu0
      %v279 = vld [vmem:[%s2] sm:$0xff]
      %281 = vset.pattern.permute.xlu0 0
      %282 = vperm.xlu0 %281, %v279
      %v283 = vpop.permute.xlu0 %282
      %v285 = vmul.f32 %v263, %v283
      %v286 = vmul.f32 %v276, %v283
      %s287 = scalar_lea.vmem %s2, 8
      %v288 = vld [vmem:[%s287] sm:$0xff]
      %290 = vset.pattern.permute.xlu0 0
      %291 = vperm.xlu0 %290, %v288
      %v292 = vpop.permute.xlu0 %291
      %v294 = vadd.f32 %v285, %v292
      %v295 = vadd.f32 %v286, %v292
      %v296 = vmax.f32 %v294, 0.0
      %v297 = vmax.f32 %v295, 0.0
      %298 = vst [vmem:[%s208] sm:$0xff] %v296
      %299 = vst [vmem:[%s208 + $0x8] sm:$0xff] %v297
      %s300 = smul.u32 2, %s19
      %p301 = scmp.lt.s32.totalorder %s18, 1
      %s302 = scalar_select %p301, %s18, 1
      %p303 = scmp.lt.s32.totalorder %s300, 1
      %s304 = scalar_select %p303, %s300, 1
      %s305 = smul.addr %s302, 2
      %s306 = sadd.s32 %s304, %s305
      %s307 = smul.addr %s306, 8
      %s308 = scalar_lea.vmem %s3, %s307
      // Predicated region
      $region33: #{conv2d_bn_relu.3} parent=31 // pred_check
        %p309 = pneg %p116
      $region34: #{conv2d_bn_relu.3} parent=31 // pred_check_branch
        %311 = sbr.rel (%p309) target = $region36
      $region35: #{conv2d_bn_relu.3} parent=31 // pred_region
        %s312 = smul.u32 2, %s19
      $region36: #{conv2d_bn_relu.3} parent=31 // pred_fallthru
        _
    $region32: #{conv2d_bn_relu.3} parent=5 // pred_fallthru
      _
    %p313 = scmp.le.s32.totalorder 2, %s9
    // Predicated region
    $region37: #{conv2d_bn_relu.3} parent=5 // pred_check
      %p314 = pneg %p313
    $region38: #{conv2d_bn_relu.3} parent=5 // pred_check_branch
      %316 = sbr.rel (%p314) target = $region40
    $region39: #{conv2d_bn_relu.3} parent=5 // pred_region
      %s317 = ssub.s32 %s9, 2
      // Predicated region
      $region41: #{conv2d_bn_relu.3} parent=39 // pred_check
        %p318 = pneg %p122
      $region42: #{conv2d_bn_relu.3} parent=39 // pred_check_branch
        %320 = sbr.rel (%p318) target = $region44
      $region43: #{conv2d_bn_relu.3} parent=39 // pred_region
        %s321 = smul.u32 2, %s21
        %p322 = scmp.lt.s32.totalorder %s20, 1
        %s323 = scalar_select %p322, %s20, 1
        %p324 = scmp.lt.s32.totalorder %s321, 1
        %s325 = scalar_select %p324, %s321, 1
        %s326 = smul.addr %s323, 2
        %s327 = sadd.s32 %s325, %s326
        %s328 = smul.addr %s327, 8
        %s329 = scalar_lea.vmem %s3, %s328
      $region44: #{conv2d_bn_relu.3} parent=39 // pred_fallthru
        _
    $region40: #{conv2d_bn_relu.3} parent=5 // pred_fallthru
      _
  $region6: #{conv2d_bn_relu.3} parent=0 // loop_footer
    %s13 = sadd.s32 1, %s9
  $region7: #{conv2d_bn_relu.3} parent=0 // loop_footer_branch
    %8 = sbr.rel target = $region3
  $region8: #{conv2d_bn_relu.3} parent=0 // loop_exit
    _

</llo_original>
